<compile_context>
chip_gen: v7x
topology: tpu7x:2x2x1
jax: 0.10.0
libtpu: 0.0.40
codegen_flags: <defaults>
</compile_context>

<pallas_src>
import math
import jax
import jax.numpy as jnp
from jax.experimental import pallas as pl
from jax.experimental.pallas import tpu as pltpu


def _round_up(x, m):
    return (x + m - 1) // m * m


def _spec(shape, index_map, nbuf=None):
    """BlockSpec with optional deeper multi-buffering (graceful fallback)."""
    if nbuf is not None and hasattr(pl, "Buffered"):
        try:
            return pl.BlockSpec(shape, index_map, pipeline_mode=pl.Buffered(nbuf))
        except TypeError:  # BlockSpec without pipeline_mode support
            pass
    return pl.BlockSpec(shape, index_map)


# --------------------------------------------------------------------------
# Phase 1: support = feature @ weight   (dense, tiled over node-row blocks)
# --------------------------------------------------------------------------
def support_kernel(feat_ref, w_ref, o_ref):
    o_ref[...] = jnp.dot(feat_ref[...], w_ref[...],
                         preferred_element_type=jnp.float32).astype(o_ref.dtype)


# --------------------------------------------------------------------------
# Phase 2: output = adj @ support + bias   (block-sparse, scalar-prefetched)
#   args: (prefetch: ids, counts) (inputs: adj_blocks, support, bias)
#         (output) (scratch: f32 accumulator)
# --------------------------------------------------------------------------
def spmm_bias_kernel(ids_ref, counts_ref, adj_ref, sup_ref, bias_ref,
                     o_ref, acc_ref):
    del ids_ref  # consumed by the index maps only
    i = pl.program_id(0)
    k = pl.program_id(1)

    @pl.when(k == 0)
    def _():
        acc_ref[...] = jnp.zeros_like(acc_ref)

    # Padded k steps already have their DMAs elided (index maps clamp k so the
    # block index repeats); this guard MUST stay so the last real tile is not
    # accumulated more than once.
    @pl.when(k < counts_ref[i])
    def _():
        acc_ref[...] += jnp.dot(adj_ref[0, 0], sup_ref[...],
                                preferred_element_type=jnp.float32)

    # Bias is added exactly once, in the finalize branch (not per k step).
    @pl.when(k == pl.num_programs(1) - 1)
    def _():
        o_ref[...] = (acc_ref[...] + bias_ref[...]).astype(o_ref.dtype)


def sp_graph_conv_layer(feature, weight, bias, adj_indices, adj_values,
                        n_nodes, *, blk=256, compute_dtype=jnp.bfloat16):
    """JAX/Pallas equivalent of SpGraphConvLayer.forward.

    feature:     [N, F_in]  float32
    weight:      [F_in, F_out] float32
    bias:        [F_out] float32 or None
    adj_indices: [2, nnz] int32 (row, col); duplicates are summed (coalesced)
    adj_values:  [nnz] float32
    blk:         square tile size for the block-sparse adj @ support matmul
    compute_dtype: dtype the adj tiles / support are streamed in (bf16 halves
                 the dominant HBM traffic; MXU accumulation stays f32).

    NOTE: block-sparsity planning uses concrete (eager) values, so this wrapper
    is meant to be called outside jit (the pallas_calls inside compile as
    usual).
    """
    N, f_in = feature.shape
    f_out = weight.shape[1]
    assert n_nodes == N

    bpe = jnp.dtype(compute_dtype).itemsize
    sub = 16 if bpe == 2 else 8          # sublane granularity for compute_dtype

    # --- tile / padding bookkeeping -----------------------------------------
    blk = max(sub, min(int(blk), _round_up(N, sub)))
    blk = _round_up(blk, sub)
    # v7x megacore: keep >= 2 row blocks so the 'parallel' axis feeds both TCs.
    if N > sub and _round_up(N, blk) // blk < 2:
        blk = max(sub, _round_up((N + 1) // 2, sub))
    Np = _round_up(N, blk)               # padded node count (rows / adj cols)
    Fp = _round_up(f_out, 128)           # lane-dense output width
    Fin_p = _round_up(f_in, 128)         # lane-dense contraction dim
    nrb = Np // blk
    ncb = Np // blk

    feat_p = jnp.zeros((Np, Fin_p), jnp.float32).at[:N, :f_in].set(
        feature.astype(jnp.float32))
    w_p = jnp.zeros((Fin_p, Fp), jnp.float32).at[:f_in, :f_out].set(
        weight.astype(jnp.float32))
    if bias is None:
        bias_p = jnp.zeros((1, Fp), jnp.float32)
    else:
        bias_p = jnp.zeros((1, Fp), jnp.float32).at[0, :f_out].set(
            bias.astype(jnp.float32))

    # --- Phase 1: support = feature @ weight (computed once, stored bf16) ---
    # Row tile decoupled from blk: largest multiple of blk <= ~512 rows that
    # divides Np, to amortize per-grid-step overhead.
    g = max(1, 512 // blk)
    while nrb % g:
        g -= 1
    p1_rows = blk * g
    nrb1 = Np // p1_rows

    # TODO(synk): for very large f_in/f_out (weight >~ 24 MiB) add K/N tiling
    # with an f32 accumulator instead of holding the whole weight resident.
    p1_bytes = (2 * p1_rows * Fin_p * 4 + 2 * Fin_p * Fp * 4
                + 2 * p1_rows * Fp * bpe)
    p1_vmem = int(min(max(p1_bytes * 3 // 2, 32 * 1024 * 1024),
                      48 * 1024 * 1024))          # stay inside v7x's 64 MiB

    support = pl.pallas_call(
        support_kernel,
        out_shape=jax.ShapeDtypeStruct((Np, Fp), compute_dtype),
        grid_spec=pltpu.PrefetchScalarGridSpec(
            num_scalar_prefetch=0,
            grid=(nrb1,),
            in_specs=[
                pl.BlockSpec((p1_rows, Fin_p), lambda i: (i, 0)),
                pl.BlockSpec((Fin_p, Fp), lambda i: (0, 0)),
            ],
            out_specs=pl.BlockSpec((p1_rows, Fp), lambda i: (i, 0)),
        ),
        compiler_params=pltpu.CompilerParams(
            dimension_semantics=("parallel",),
            vmem_limit_bytes=p1_vmem),
        cost_estimate=pl.CostEstimate(
            flops=2 * Np * Fin_p * Fp,
            transcendentals=0,
            bytes_accessed=4 * (Np * Fin_p + Fin_p * Fp) + bpe * Np * Fp),
    )(feat_p, w_p)

    # --- Block-sparsity planning straight from COO (no dense N x N pass) ----
    rows = adj_indices[0].astype(jnp.int32)
    cols = adj_indices[1].astype(jnp.int32)
    vals = adj_values.astype(jnp.float32)
    rb = rows // blk
    cb = cols // blk

    nz = jnp.zeros((nrb, ncb), jnp.bool_).at[rb, cb].set(True)    # [nrb, ncb]
    counts = nz.sum(axis=1).astype(jnp.int32)                     # [nrb]
    maxb = max(int(jnp.max(counts)), 1)

    # Rank (slot) of each nonzero col-block within its row block (ascending),
    # and the matching col-block-id table consumed by the support index_map.
    slot = (jnp.cumsum(nz.astype(jnp.int32), axis=1) - 1)         # [nrb, ncb]
    order = jnp.argsort(jnp.where(nz, 0, 1), axis=1, stable=True)
    blk_ids = order[:, :maxb].astype(jnp.int32)                   # [nrb, maxb]
    ids_flat = blk_ids.reshape(-1)                                # 1-D SMEM

    # Pack only the nonzero tiles: [nrb, maxb, blk, blk].  Scatter-add in f32
    # (duplicate COO entries coalesce by summation), then cast for streaming.
    adj_bs = jnp.zeros((nrb, maxb, blk, blk), jnp.float32).at[
        rb, slot[rb, cb], rows % blk, cols % blk
    ].add(vals).astype(compute_dtype)

    # --- Phase 2: block-sparse adj @ support + bias --------------------------
    maxb_const = maxb

    def _k_eff(i, k, counts_ref):
        # Once k >= counts[i], return the previous step's block index so the
        # pipeline elides the DMA for the padded step entirely.
        return jnp.minimum(k, jnp.maximum(counts_ref[i] - 1, 0))

    def adj_map(i, k, ids_ref, counts_ref):
        return (i, _k_eff(i, k, counts_ref), 0, 0)

    def sup_map(i, k, ids_ref, counts_ref):
        return (ids_ref[i * maxb_const + _k_eff(i, k, counts_ref)], 0)

    def bias_map(i, k, ids_ref, counts_ref):
        return (0, 0)

    def out_map(i, k, ids_ref, counts_ref):
        return (i, 0)

    nnz_blocks = int(jnp.sum(counts))
    p2_bytes = (3 * blk * blk * bpe + 3 * blk * Fp * bpe + 2 * Fp * 4
                + 2 * blk * Fp * 4 + blk * Fp * 4)
    p2_vmem = int(min(max(p2_bytes * 2, 32 * 1024 * 1024), 48 * 1024 * 1024))

    out_p = pl.pallas_call(
        spmm_bias_kernel,
        out_shape=jax.ShapeDtypeStruct((Np, Fp), jnp.float32),
        grid_spec=pltpu.PrefetchScalarGridSpec(
            num_scalar_prefetch=2,
            grid=(nrb, maxb),
            in_specs=[
                _spec((1, 1, blk, blk), adj_map, nbuf=3),   # irregular gather:
                _spec((blk, Fp), sup_map, nbuf=3),          # 3-deep buffering
                pl.BlockSpec((1, Fp), bias_map),
            ],
            out_specs=pl.BlockSpec((blk, Fp), out_map),
            scratch_shapes=[pltpu.VMEM((blk, Fp), jnp.float32)],
        ),
        compiler_params=pltpu.CompilerParams(
            dimension_semantics=("parallel", "arbitrary"),
            vmem_limit_bytes=p2_vmem),
        cost_estimate=pl.CostEstimate(
            flops=2 * nnz_blocks * blk * blk * Fp,
            transcendentals=0,
            bytes_accessed=bpe * nnz_blocks * (blk * blk + blk * Fp)
                           + 4 * (Fp + Np * Fp)),
    )(ids_flat, counts, adj_bs, support, bias_p)

    # Slice off row / lane padding.
    return out_p[:N, :f_out]


if __name__ == "__main__":
    key = jax.random.PRNGKey(0)
    k_feat, k_w, k_b, k_val = jax.random.split(key, 4)

    # Small shapes implied by the module: N nodes, in_features -> out_features.
    N, in_features, out_features = 40, 32, 64

    # Node features.
    feature = jax.random.normal(k_feat, (N, in_features), dtype=jnp.float32)

    # Deterministic parameter init matching the module's __init__:
    # weight: xavier_uniform_ -> U(-a, a), a = sqrt(6 / (fan_in + fan_out))
    a = math.sqrt(6.0 / (in_features + out_features))
    weight = jax.random.uniform(k_w, (in_features, out_features),
                                minval=-a, maxval=a, dtype=jnp.float32)
    # bias: U(-stdv, stdv), stdv = 1/sqrt(out_features)
    stdv = 1.0 / math.sqrt(out_features)
    bias = jax.random.uniform(k_b, (out_features,),
                              minval=-stdv, maxval=stdv, dtype=jnp.float32)

    # Deterministic block-structured sparse adjacency (blk=16 tiles):
    #   row block 0 (nodes 0-15):  self loops only                  -> 1 col blk
    #   row block 1 (nodes 16-31): self loops + edges into block 0  -> 2 col blks
    #   row block 2 (nodes 32-39): self + edges into blocks 0 and 1 -> 3 col blks
    # Exercises the padded-step skip / DMA-elision path and node-row padding.
    b0 = jnp.arange(0, 16, dtype=jnp.int32)
    b1 = jnp.arange(16, 32, dtype=jnp.int32)
    b2 = jnp.arange(32, 40, dtype=jnp.int32)
    rows = jnp.concatenate([b0, b1, b1, b2, b2, b2])
    cols = jnp.concatenate([b0, b1, b1 - 16, b2, b2 - 32, b2 - 16])
    adj_indices = jnp.stack([rows, cols], axis=0)
    adj_values = jax.random.uniform(k_val, (adj_indices.shape[1],),
                                    minval=0.1, maxval=1.0, dtype=jnp.float32)

    out = sp_graph_conv_layer(feature, weight, bias,
                              adj_indices, adj_values, N, blk=16)
    jax.block_until_ready(out)

    # Pure-JAX reference check (f32).  Tolerance covers bf16 streaming of the
    # adjacency tiles and of support (accumulation stays f32 in the kernel).
    adj_dense = jnp.zeros((N, N), jnp.float32).at[
        adj_indices[0], adj_indices[1]].add(adj_values)
    ref = adj_dense @ (feature @ weight) + bias[None, :]
    assert out.shape == (N, out_features)
    assert jnp.allclose(out, ref, atol=5e-2, rtol=5e-2), \
        float(jnp.max(jnp.abs(out - ref)))

    print("KERNEL_OK")
</pallas_src>

<mosaic_0001>
module attributes {stable_mosaic.version = 11 : i64} {
  func.func @support_kernel(%arg0: i32, %arg1: memref<48x128xf32, #tpu.memory_space<vmem>>, %arg2: memref<128x128xf32, #tpu.memory_space<vmem>>, %arg3: memref<48x128xbf16, #tpu.memory_space<vmem>>) attributes {dimension_semantics = [#tpu.dimension_semantics<parallel>], iteration_bounds = array<i64: 1>, scalar_prefetch = 0 : i64, scratch_operands = 0 : i64, tpu.core_type = #tpu.core_type<tc>, window_params = [{transform_indices = @transform_0, window_bounds = array<i64: 48, 128>}, {pipeline_mode = #tpu.pipeline_mode<synchronous>, transform_indices = @transform_1, window_bounds = array<i64: 128, 128>}, {transform_indices = @transform_2, window_bounds = array<i64: 48, 128>}]} {
    %c0 = arith.constant 0 : index
    %c0_0 = arith.constant 0 : index
    %0 = vector.load %arg1[%c0, %c0_0] : memref<48x128xf32, #tpu.memory_space<vmem>>, vector<48x128xf32>
    %c0_1 = arith.constant 0 : index
    %c0_2 = arith.constant 0 : index
    %1 = vector.load %arg2[%c0_1, %c0_2] : memref<128x128xf32, #tpu.memory_space<vmem>>, vector<128x128xf32>
    %cst = arith.constant dense<0.000000e+00> : vector<48x128xf32>
    %2 = tpu.matmul %0, %1, %cst {dimension_numbers = #tpu.dot_dimension_numbers<[1], [0], [0], [1], [0, 0, 1, 1], [], []>} : vector<48x128xf32>, vector<128x128xf32>, vector<48x128xf32> -> vector<48x128xf32>
    %3 = arith.truncf %2 : vector<48x128xf32> to vector<48x128xbf16>
    %c0_3 = arith.constant 0 : index
    %c0_4 = arith.constant 0 : index
    %4 = vector.load %arg3[%c0_3, %c0_4] : memref<48x128xbf16, #tpu.memory_space<vmem>>, vector<48x128xbf16>
    tpu.vector_store %arg3[%c0_3, %c0_4], %3 {strides = array<i32>} : memref<48x128xbf16, #tpu.memory_space<vmem>>, vector<48x128xbf16>,
    return
  }
  func.func @transform_0(%arg0: i32) -> (i32, i32) {
    %c0_i32 = arith.constant 0 : i32
    %c0_i32_0 = arith.constant 0 : i32
    return %arg0, %c0_i32 : i32, i32
  }
  func.func @transform_1(%arg0: i32) -> (i32, i32) {
    %c0_i32 = arith.constant 0 : i32
    %c0_i32_0 = arith.constant 0 : i32
    %c0_i32_1 = arith.constant 0 : i32
    return %c0_i32, %c0_i32_0 : i32, i32
  }
  func.func @transform_2(%arg0: i32) -> (i32, i32) {
    %c0_i32 = arith.constant 0 : i32
    %c0_i32_0 = arith.constant 0 : i32
    return %arg0, %c0_i32 : i32, i32
  }
}

</mosaic_0001>

<llo_original>
// kernel: tpu_custom_call.1
$region0: #{tpu_custom_call.1}
  #allocation0 [shape = 'u32[]', space=smem, size = 0x4, offset = 0x4, fixed_abs, tag = 'smem constant byte address 0x4 - core index']
  #allocation1 [shape = 'u32[144,128]{1,0:T(1,128)}', space=vmem, size = 0x12000, scoped, tag = 'internal scratch']
  %s0 = inlined_call_operand.hbm [shape: f32[48,128], index: 0, kind: input, shape index: {}]
  %s1 = inlined_call_operand.hbm [shape: f32[128,128], index: 1, kind: input, shape index: {}]
  %s2 = inlined_call_operand.hbm [shape: bf16[48,128], index: 2, kind: output, shape index: {}]
  %s3 = sld [smem:[#allocation0]]
  $region26: #{tpu_custom_call.1} parent=0
    _
  %s5 = ssub.s32 1, %s3
  %s6 = scalar_select 0, %s5, %s3
  $region1: #{tpu_custom_call.1} parent=0
    #allocation2 [shape = 'u8[24576]{0}', space=vmem, size = 0x6000, scoped, tag = 'input window, operand 0, single buffered']
    #allocation3 [shape = 's32[1]{0}', space=sflag, size = 0x4, scoped, tag = 'scoped memory for tpu_custom_call.1']
    #allocation4 [shape = 's32[1]{0}', space=sflag, size = 0x4, scoped, tag = 'scoped memory for tpu_custom_call.1']
    #allocation5 [shape = 'u8[65536]{0}', space=vmem, size = 0x10000, scoped, tag = 'input window, operand 1, single buffered']
    #allocation6 [shape = 's32[1]{0}', space=sflag, size = 0x4, scoped, tag = 'scoped memory for tpu_custom_call.1']
    #allocation7 [shape = 'u8[12288]{0}', space=vmem, size = 0x3000, scoped, tag = 'output window, operand 0, single buffered']
    %7 = vsyncpa [#allocation3], 0
    %8 = vsyncpa [#allocation6], 0
    %9 = vsyncpa [#allocation4], 0
    // Predicated region
    $region2: #{tpu_custom_call.1} parent=1 // pred_check
      _
    $region3: #{tpu_custom_call.1} parent=1 // pred_check_branch
      %11 = sbr.rel (0) target = $region5
    $region4: #{tpu_custom_call.1} parent=1 // pred_region
      %s13 = ssub.s32 768, 768
      %14 = vsyncadd [#allocation3], %s13
      %s15 = sshll.u32 [#allocation2], 4
      %s16 = int_to_ptr.vmem [resolvable:$true] %s15
      %21 = dma.hbm_to_vmem [thread:$0]  %s0, 768, %s16, [#allocation3], 128, 128, 8
    $region5: #{tpu_custom_call.1} parent=1 // pred_fallthru
      _
    // Predicated region
    $region6: #{tpu_custom_call.1} parent=1 // pred_check
      _
    $region7: #{tpu_custom_call.1} parent=1 // pred_check_branch
      %23 = sbr.rel (0) target = $region9
    $region8: #{tpu_custom_call.1} parent=1 // pred_region
      %s25 = ssub.s32 2048, 2048
      %26 = vsyncadd [#allocation6], %s25
      %s27 = sshll.u32 [#allocation5], 4
      %s28 = int_to_ptr.vmem [resolvable:$true] %s27
      %33 = dma.hbm_to_vmem [thread:$0]  %s1, 2048, %s28, [#allocation6], 128, 128, 8
    $region9: #{tpu_custom_call.1} parent=1 // pred_fallthru
      _
    // Predicated region
    $region10: #{tpu_custom_call.1} parent=1 // pred_check
      _
    $region11: #{tpu_custom_call.1} parent=1 // pred_check_branch
      %35 = sbr.rel (0) target = $region13
    $region12: #{tpu_custom_call.1} parent=1 // pred_region
      %36 = dma.done [#allocation3], 768
    $region13: #{tpu_custom_call.1} parent=1 // pred_fallthru
      _
    // Predicated region
    $region14: #{tpu_custom_call.1} parent=1 // pred_check
      _
    $region15: #{tpu_custom_call.1} parent=1 // pred_check_branch
      %38 = sbr.rel (0) target = $region17
    $region16: #{tpu_custom_call.1} parent=1 // pred_region
      %39 = dma.done [#allocation6], 2048
    $region17: #{tpu_custom_call.1} parent=1 // pred_fallthru
      _
    %v40 = vld [vmem:[#allocation2] sm:$0xff]
    %v41 = vld [vmem:[#allocation2 + $0x8] sm:$0xff]
    %v42 = vld [vmem:[#allocation2 + $0x10] sm:$0xff]
    %v43 = vld [vmem:[#allocation2 + $0x18] sm:$0xff]
    %v44 = vld [vmem:[#allocation2 + $0x20] sm:$0xff]
    %v45 = vld [vmem:[#allocation2 + $0x28] sm:$0xff]
    %v46 = vld [vmem:[#allocation5] sm:$0xff]
    %v47 = vld [vmem:[#allocation5 + $0x8] sm:$0xff]
    %v48 = vld [vmem:[#allocation5 + $0x10] sm:$0xff]
    %v49 = vld [vmem:[#allocation5 + $0x18] sm:$0xff]
    %v50 = vld [vmem:[#allocation5 + $0x20] sm:$0xff]
    %v51 = vld [vmem:[#allocation5 + $0x28] sm:$0xff]
    %v52 = vld [vmem:[#allocation5 + $0x30] sm:$0xff]
    %v53 = vld [vmem:[#allocation5 + $0x38] sm:$0xff]
    %v54 = vld [vmem:[#allocation5 + $0x40] sm:$0xff]
    %v55 = vld [vmem:[#allocation5 + $0x48] sm:$0xff]
    %v56 = vld [vmem:[#allocation5 + $0x50] sm:$0xff]
    %v57 = vld [vmem:[#allocation5 + $0x58] sm:$0xff]
    %v58 = vld [vmem:[#allocation5 + $0x60] sm:$0xff]
    %v59 = vld [vmem:[#allocation5 + $0x68] sm:$0xff]
    %v60 = vld [vmem:[#allocation5 + $0x70] sm:$0xff]
    %v61 = vld [vmem:[#allocation5 + $0x78] sm:$0xff]
    %62 = vmatprep.subr.mxu0 0.0
    %63 = vmatpush1.msra.mxu0 %v46
    %64 = vmatprep.subr.mxu0 0.0
    %65 = vmatpush1.msra.mxu0 %v47
    %66 = vmatprep.subr.mxu0 0.0
    %67 = vmatpush1.msra.mxu0 %v48
    %68 = vmatprep.subr.mxu0 0.0
    %69 = vmatpush1.msra.mxu0 %v49
    %70 = vmatprep.subr.mxu0 0.0
    %71 = vmatpush1.msra.mxu0 %v50
    %72 = vmatprep.subr.mxu0 0.0
    %73 = vmatpush1.msra.mxu0 %v51
    %74 = vmatprep.subr.mxu0 0.0
    %75 = vmatpush1.msra.mxu0 %v52
    %76 = vmatprep.subr.mxu0 0.0
    %77 = vmatpush1.msra.mxu0 %v53
    %78 = vmatprep.subr.mxu0 0.0
    %79 = vmatpush1.msra.mxu0 %v54
    %80 = vmatprep.subr.mxu0 0.0
    %81 = vmatpush1.msra.mxu0 %v55
    %82 = vmatprep.subr.mxu0 0.0
    %83 = vmatpush1.msra.mxu0 %v56
    %84 = vmatprep.subr.mxu0 0.0
    %85 = vmatpush1.msra.mxu0 %v57
    %86 = vmatprep.subr.mxu0 0.0
    %87 = vmatpush1.msra.mxu0 %v58
    %88 = vmatprep.subr.mxu0 0.0
    %89 = vmatpush1.msra.mxu0 %v59
    %90 = vmatprep.subr.mxu0 0.0
    %91 = vmatpush1.msra.mxu0 %v60
    %92 = vmatprep.subr.mxu0 0.0
    %93 = vmatpush1.msra.mxu0 %v61
    %94 = vmatprep.subr.mxu0 0.0
    %95 = vmatpush1.msra.mxu0 0.0
    %96 = vmatprep.subr.mxu0 0.0
    %97 = vmatpush1.msra.mxu0 0.0
    %98 = vmatprep.subr.mxu0 0.0
    %99 = vmatpush1.msra.mxu0 0.0
    %100 = vmatprep.subr.mxu0 0.0
    %101 = vmatpush1.msra.mxu0 0.0
    %102 = vmatprep.subr.mxu0 0.0
    %103 = vmatpush1.msra.mxu0 0.0
    %104 = vmatprep.subr.mxu0 0.0
    %105 = vmatpush1.msra.mxu0 0.0
    %106 = vmatprep.subr.mxu0 0.0
    %107 = vmatpush1.msra.mxu0 0.0
    %108 = vmatprep.subr.mxu0 0.0
    %109 = vmatpush1.msra.mxu0 0.0
    %110 = vmatprep.subr.mxu0 0.0
    %111 = vmatpush1.msra.mxu0 0.0
    %112 = vmatprep.subr.mxu0 0.0
    %113 = vmatpush1.msra.mxu0 0.0
    %114 = vmatprep.subr.mxu0 0.0
    %115 = vmatpush1.msra.mxu0 0.0
    %116 = vmatprep.subr.mxu0 0.0
    %117 = vmatpush1.msra.mxu0 0.0
    %118 = vmatprep.subr.mxu0 0.0
    %119 = vmatpush1.msra.mxu0 0.0
    %120 = vmatprep.subr.mxu0 0.0
    %121 = vmatpush1.msra.mxu0 0.0
    %122 = vmatprep.subr.mxu0 0.0
    %123 = vmatpush1.msra.mxu0 0.0
    %124 = vmatprep.subr.mxu0 0.0
    %125 = vmatpush1.msra.mxu0 0.0
    %126 = vmatprep.mubr.f32.mxu0 0.0
    %127 = vmatmul.mubr.f32.gmra.mrb[0].mxu0 %v40
    %v128 = vpop.f32.mrb[0].mxu0
    %v129 = vadd.f32 0.0, %v128
    %v130 = vpop.f32.mrb[0].mxu0
    %131 = vmatprep.mubr.f32.mxu0 0.0
    %132 = vmatmul.mubr.f32.gmra.mrb[0].mxu0 %v41
    %v133 = vpop.f32.mrb[0].mxu0
    %v134 = vadd.f32 0.0, %v133
    %v135 = vpop.f32.mrb[0].mxu0
    %136 = vmatprep.mubr.f32.mxu0 0.0
    %137 = vmatmul.mubr.f32.gmra.mrb[0].mxu0 %v42
    %v138 = vpop.f32.mrb[0].mxu0
    %v139 = vadd.f32 0.0, %v138
    %v140 = vpop.f32.mrb[0].mxu0
    %141 = vmatprep.mubr.f32.mxu0 0.0
    %142 = vmatmul.mubr.f32.gmra.mrb[0].mxu0 %v43
    %v143 = vpop.f32.mrb[0].mxu0
    %v144 = vadd.f32 0.0, %v143
    %v145 = vpop.f32.mrb[0].mxu0
    %146 = vmatprep.mubr.f32.mxu0 0.0
    %147 = vmatmul.mubr.f32.gmra.mrb[0].mxu0 %v44
    %v148 = vpop.f32.mrb[0].mxu0
    %v149 = vadd.f32 0.0, %v148
    %v150 = vpop.f32.mrb[0].mxu0
    %151 = vmatprep.mubr.f32.mxu0 0.0
    %152 = vmatmul.mubr.f32.gmra.mrb[0].mxu0 %v45
    %v153 = vpop.f32.mrb[0].mxu0
    %v154 = vadd.f32 0.0, %v153
    %v155 = vpop.f32.mrb[0].mxu0
    %156 = vdwg.mxu0
    %v157 = vpack.c.bf16 %v134, %v129
    %v158 = vpack.c.bf16 %v144, %v139
    %v159 = vpack.c.bf16 %v154, %v149
    %v163 = vunpack.c.l.b16 %v157
    %v164 = vunpack.c.h.b16 %v157
    %v165 = vunpack.c.l.b16 %v158
    %v166 = vunpack.c.h.b16 %v158
    %v167 = vunpack.c.l.b16 %v159
    %v168 = vunpack.c.h.b16 %v159
    %v169 = vpack.c.b16 %v163, %v163
    %v170 = vpack.c.b16 %v164, %v164
    %v171 = vpack.c.b16 %v165, %v165
    %v172 = vpack.c.b16 %v166, %v166
    %v173 = vpack.c.b16 %v167, %v167
    %v174 = vpack.c.b16 %v168, %v168
    %181 = vst [vmem:[#allocation7] sm:$0xf] %v169
    %182 = vst [vmem:[#allocation7 + $0x4] sm:$0xf] %v170
    %183 = vst [vmem:[#allocation7 + $0x8] sm:$0xf] %v171
    %184 = vst [vmem:[#allocation7 + $0xc] sm:$0xf] %v172
    %185 = vst [vmem:[#allocation7 + $0x10] sm:$0xf] %v173
    %186 = vst [vmem:[#allocation7 + $0x14] sm:$0xf] %v174
    // Predicated region
    $region18: #{tpu_custom_call.1} parent=1 // pred_check
      _
    $region19: #{tpu_custom_call.1} parent=1 // pred_check_branch
      %188 = sbr.rel (0) target = $region21
    $region20: #{tpu_custom_call.1} parent=1 // pred_region
      %s190 = ssub.s32 384, 384
      %191 = vsyncadd [#allocation4], %s190
      %s192 = sshll.u32 [#allocation7], 4
      %s193 = int_to_ptr.vmem [resolvable:$true] %s192
      %198 = dma.vmem_to_hbm [thread:$0]  %s193, 384, %s2, [#allocation4], 64, 64, 4
    $region21: #{tpu_custom_call.1} parent=1 // pred_fallthru
      _
    // Predicated region
    $region22: #{tpu_custom_call.1} parent=1 // pred_check
      _
    $region23: #{tpu_custom_call.1} parent=1 // pred_check_branch
      %200 = sbr.rel (0) target = $region25
    $region24: #{tpu_custom_call.1} parent=1 // pred_region
      %201 = dma.done [#allocation4], 384
    $region25: #{tpu_custom_call.1} parent=1 // pred_fallthru
      _
    %202 = vsyncpa [#allocation3], 1
    %203 = vsyncpa [#allocation6], 1
    %204 = vsyncpa [#allocation4], 1

</llo_original>
